<compile_context>
chip_gen: v7x
topology: tpu7x:2x2x1
jax: 0.10.0
libtpu: 0.0.40
codegen_flags: <defaults>
</compile_context>

<pallas_src>
import functools

import jax
import jax.numpy as jnp
from jax import lax
from jax.experimental import pallas as pl
from jax.experimental.pallas import tpu as pltpu

EPS = 1e-5


def _double_conv_kernel(inv_count, H, W, Cout,
                        x_ref, w1_ref, g1_ref, b1_ref,
                        w2_ref, g2_ref, b2_ref, o_ref):
    f32 = jnp.float32
    M = x_ref.shape[0]                 # N * H lane-dense rows
    l_out = W * Cout

    # Row index within each image; rows where the cyclic sublane roll wraps
    # across an image boundary are exactly the SAME-padding rows -> zero them.
    h = lax.broadcasted_iota(jnp.int32, (M, 1), 0) % H
    has_prev = h > 0                   # row h-1 exists inside the image
    has_next = h < (H - 1)             # row h+1 exists inside the image

    def conv3x3(a, w_ref):
        # a: (M, L).  H neighbourhood = XLU rolls + VPU masks (slots the MXU
        # doesn't use); W neighbourhood + 3x3 taps are folded into three
        # lane-aligned per-tap block-Toeplitz matmuls (no (M, 3L) concat).
        prev = jnp.where(has_prev, pltpu.roll(a, shift=1, axis=0), 0.0)
        # roll by M-1 == roll by -1 (avoid negative shifts).
        nxt = jnp.where(has_next, pltpu.roll(a, shift=M - 1, axis=0), 0.0)
        acc = jnp.dot(prev, w_ref[0], preferred_element_type=f32)
        acc = acc + jnp.dot(a, w_ref[1], preferred_element_type=f32)
        acc = acc + jnp.dot(nxt, w_ref[2], preferred_element_type=f32)
        return acc

    def lane_group_allreduce(v):
        # v: (1, W*Cout) laid out (w, c).  log2(W) cyclic lane roll-and-adds
        # sum over the W groups and leave the per-channel total already
        # broadcast to every group (replaces the old (1,L)x(L,L) rmat matmul).
        shift = Cout
        while shift < l_out:
            v = v + pltpu.roll(v, shift=shift, axis=1)
            shift *= 2
        return v

    def bn_relu(acc, gamma_t, beta_t):
        # Training-mode batch statistics over all (N, H, W) per channel.
        mean_t = lane_group_allreduce(
            jnp.sum(acc, axis=0, keepdims=True)) * inv_count
        c = acc - mean_t                                  # centered, reused
        var_t = lane_group_allreduce(
            jnp.sum(c * c, axis=0, keepdims=True)) * inv_count
        scale = lax.rsqrt(var_t + EPS) * gamma_t
        return jnp.maximum(c * scale + beta_t, 0.0)

    x = x_ref[...].astype(f32)
    y1 = bn_relu(conv3x3(x, w1_ref), g1_ref[...], b1_ref[...])
    y2 = bn_relu(conv3x3(y1, w2_ref), g2_ref[...], b2_ref[...])
    o_ref[...] = y2.astype(o_ref.dtype)


def _tap_blocks(w_hwio, W):
    """(3, 3, Ci, Co) -> (3, W*Ci, W*Co): per-row-tap block-Toeplitz weights."""
    _, _, Ci, Co = w_hwio.shape
    wi = jnp.arange(W)[:, None]            # input column
    wo = jnp.arange(W)[None, :]            # output column
    dx = wi - wo + 1                       # column tap, valid in [0, 3)
    valid = (dx >= 0) & (dx < 3)
    taps = w_hwio[:, jnp.clip(dx, 0, 2)]   # (3, W, W, Ci, Co) = [dy, wi, wo, ci, co]
    taps = jnp.where(valid[None, :, :, None, None], taps, 0.0)
    # -> (dy, wi, ci, wo, co): rows = wi*Ci + ci, cols = wo*Co + co.
    return taps.transpose(0, 1, 3, 2, 4).reshape(3, W * Ci, W * Co)


def double_conv(x_nchw, w1, g1, b1, w2, g2, b2):
    """x_nchw: (N, Cin, H, W). w1: (3,3,Cin,Cout), w2: (3,3,Cout,Cout) (HWIO)."""
    N, Cin, H, W = x_nchw.shape
    Cout = w1.shape[-1]
    M = N * H
    l_out = W * Cout
    assert W & (W - 1) == 0, "lane_group_allreduce assumes W is a power of two"
    # TODO(synk): general W needs a final partial butterfly step (or the old
    # rmat-dot reduction path).

    # Host-side packing (tiny, plain XLA, outside the kernel).
    # TODO(synk): callers that can produce/consume NHWC (or the fused
    # (N*H, W*C) layout directly, e.g. chained DoubleConv -> pool) should skip
    # these layout transposes -- each is an extra HBM pass at real sizes.
    x_nhwc = jnp.transpose(x_nchw, (0, 2, 3, 1))
    cin_p = Cin
    while (W * cin_p) % 128:               # pad Cin so the input lane axis is
        cin_p += 1                         # a full multiple of 128 lanes
    if cin_p != Cin:
        x_nhwc = jnp.pad(x_nhwc, ((0, 0), (0, 0), (0, 0), (0, cin_p - Cin)))
        w1 = jnp.pad(w1, ((0, 0), (0, 0), (0, cin_p - Cin), (0, 0)))
    x2d = x_nhwc.reshape(M, W * cin_p)

    w1s = _tap_blocks(w1.astype(jnp.float32), W)          # (3, W*cin_p, l_out)
    w2s = _tap_blocks(w2.astype(jnp.float32), W)          # (3, l_out,   l_out)
    g1t = jnp.tile(g1.astype(jnp.float32), W).reshape(1, l_out)
    b1t = jnp.tile(b1.astype(jnp.float32), W).reshape(1, l_out)
    g2t = jnp.tile(g2.astype(jnp.float32), W).reshape(1, l_out)
    b2t = jnp.tile(b2.astype(jnp.float32), W).reshape(1, l_out)

    # TODO(synk): for real UNet sizes, add an H-strip grid (dimension_semantics
    # "parallel" so v7x's two TensorCores split it) with a two-pass BN (global
    # sum/sumsq accumulated on an "arbitrary" axis), tile W so the fused lane
    # width stays 128-512, and size strips per generation (M >= 256 rows for
    # v6e/v7x's 256-wide MXU, >= 128 for v5e; VMEM budget 64 MiB on v7x).  At
    # this test size the whole problem is < 0.5 MiB of VMEM, so a single
    # invocation is simpler and faster.
    kernel = functools.partial(_double_conv_kernel, 1.0 / float(N * H * W),
                               H, W, Cout)
    out2d = pl.pallas_call(
        kernel,
        out_shape=jax.ShapeDtypeStruct((M, l_out), jnp.float32),
        in_specs=[pl.BlockSpec(memory_space=pltpu.MemorySpace.VMEM)] * 7,
        out_specs=pl.BlockSpec(memory_space=pltpu.MemorySpace.VMEM),
        compiler_params=pltpu.CompilerParams(vmem_limit_bytes=32 * 1024 * 1024),
    )(x2d, w1s, g1t, b1t, w2s, g2t, b2t)

    return out2d.reshape(N, H, W, Cout).transpose(0, 3, 1, 2)   # back to NCHW


def _reference(x_nchw, w1, g1, b1, w2, g2, b2):
    """Pure-JAX reference of the PyTorch forward (training-mode BN)."""
    def conv(x, w):  # x NHWC, w HWIO
        return lax.conv_general_dilated(
            x, w, window_strides=(1, 1), padding="SAME",
            dimension_numbers=("NHWC", "HWIO", "NHWC"))

    def bn_relu(y, g, b):
        mean = jnp.mean(y, axis=(0, 1, 2), keepdims=True)
        var = jnp.mean((y - mean) ** 2, axis=(0, 1, 2), keepdims=True)
        y = (y - mean) * lax.rsqrt(var + EPS) * g + b
        return jnp.maximum(y, 0.0)

    x = jnp.transpose(x_nchw, (0, 2, 3, 1))
    y = bn_relu(conv(x, w1), g1, b1)
    y = bn_relu(conv(y, w2), g2, b2)
    return jnp.transpose(y, (0, 3, 1, 2))


if __name__ == "__main__":
    N, Cin, Cout, H, W = 2, 4, 8, 16, 16

    key = jax.random.PRNGKey(0)
    k1, k2, kx = jax.random.split(key, 3)

    # Deterministic parameter init (kaiming-ish fan-in scaling), HWIO layout.
    w1 = jax.random.normal(k1, (3, 3, Cin, Cout), jnp.float32) * (2.0 / (9 * Cin)) ** 0.5
    w2 = jax.random.normal(k2, (3, 3, Cout, Cout), jnp.float32) * (2.0 / (9 * Cout)) ** 0.5
    g1 = 1.0 + 0.1 * jnp.arange(Cout, dtype=jnp.float32)
    b1 = 0.05 * jnp.arange(Cout, dtype=jnp.float32)
    g2 = 1.0 - 0.05 * jnp.arange(Cout, dtype=jnp.float32)
    b2 = -0.03 * jnp.arange(Cout, dtype=jnp.float32)

    x = jax.random.normal(kx, (N, Cin, H, W), jnp.float32)

    out = jax.block_until_ready(double_conv(x, w1, g1, b1, w2, g2, b2))
    ref = jax.block_until_ready(_reference(x, w1, g1, b1, w2, g2, b2))

    assert out.shape == (N, Cout, H, W), out.shape
    assert jnp.allclose(out, ref, atol=1e-4, rtol=1e-4), float(jnp.abs(out - ref).max())
    print("KERNEL_OK")
</pallas_src>

<mosaic_0001>
module attributes {stable_mosaic.version = 11 : i64} {
  func.func @_double_conv_kernel(%arg0: memref<32x128xf32, #tpu.memory_space<vmem>>, %arg1: memref<3x128x128xf32, #tpu.memory_space<vmem>>, %arg2: memref<1x128xf32, #tpu.memory_space<vmem>>, %arg3: memref<1x128xf32, #tpu.memory_space<vmem>>, %arg4: memref<3x128x128xf32, #tpu.memory_space<vmem>>, %arg5: memref<1x128xf32, #tpu.memory_space<vmem>>, %arg6: memref<1x128xf32, #tpu.memory_space<vmem>>, %arg7: memref<32x128xf32, #tpu.memory_space<vmem>>) attributes {dimension_semantics = [], scalar_prefetch = 0 : i64, scratch_operands = 0 : i64, tpu.core_type = #tpu.core_type<tc>} {
    %0 = tpu.iota {dimensions = array<i32: 0>} : vector<32x1xi32>
    %c16_i32 = arith.constant 16 : i32
    %c0_i32 = arith.constant 0 : i32
    %1 = arith.cmpi eq, %c16_i32, %c0_i32 : i32
    %c1_i32 = arith.constant 1 : i32
    %2 = arith.select %1, %c1_i32, %c16_i32 : i32
    %3 = vector.broadcast %2 : i32 to vector<32x1xi32>
    %4 = arith.remsi %0, %3 : vector<32x1xi32>
    %c0_i32_0 = arith.constant 0 : i32
    %5 = vector.broadcast %c0_i32_0 : i32 to vector<32x1xi32>
    %6 = arith.cmpi ne, %4, %5 : vector<32x1xi32>
    %c0_i32_1 = arith.constant 0 : i32
    %7 = vector.broadcast %c0_i32_1 : i32 to vector<32x1xi32>
    %8 = arith.cmpi slt, %4, %7 : vector<32x1xi32>
    %c0_i32_2 = arith.constant 0 : i32
    %9 = arith.cmpi slt, %2, %c0_i32_2 : i32
    %10 = vector.broadcast %9 : i1 to vector<32x1xi1>
    %11 = vector.broadcast %10 : vector<32x1xi1> to vector<32x1xi1>
    %12 = arith.xori %8, %11 : vector<32x1xi1>
    %13 = arith.andi %12, %6 : vector<32x1xi1>
    %14 = vector.broadcast %2 : i32 to vector<32x1xi32>
    %15 = arith.addi %4, %14 : vector<32x1xi32>
    %16 = arith.select %13, %15, %4 : vector<32x1xi1>, vector<32x1xi32>
    %c0_i32_3 = arith.constant 0 : i32
    %17 = vector.broadcast %c0_i32_3 : i32 to vector<32x1xi32>
    %18 = arith.cmpi sgt, %16, %17 : vector<32x1xi32>
    %c15_i32 = arith.constant 15 : i32
    %19 = vector.broadcast %c15_i32 : i32 to vector<32x1xi32>
    %20 = arith.cmpi slt, %16, %19 : vector<32x1xi32>
    %c0 = arith.constant 0 : index
    %c0_4 = arith.constant 0 : index
    %21 = vector.load %arg0[%c0, %c0_4] : memref<32x128xf32, #tpu.memory_space<vmem>>, vector<32x128xf32>
    %c1_i32_5 = arith.constant 1 : i32
    %22 = tpu.dynamic_rotate %21 by %c1_i32_5 dim 0 : vector<32x128xf32>, i32 -> vector<32x128xf32>
    %cst = arith.constant 0.000000e+00 : f32
    %23 = vector.shape_cast %18 : vector<32x1xi1> to vector<32x1xi1>
    %24 = vector.broadcast %23 : vector<32x1xi1> to vector<32x128xi1>
    %25 = vector.broadcast %cst : f32 to vector<32x128xf32>
    %26 = arith.select %24, %22, %25 : vector<32x128xi1>, vector<32x128xf32>
    %c31_i32 = arith.constant 31 : i32
    %27 = tpu.dynamic_rotate %21 by %c31_i32 dim 0 : vector<32x128xf32>, i32 -> vector<32x128xf32>
    %cst_6 = arith.constant 0.000000e+00 : f32
    %28 = vector.shape_cast %20 : vector<32x1xi1> to vector<32x1xi1>
    %29 = vector.broadcast %28 : vector<32x1xi1> to vector<32x128xi1>
    %30 = vector.broadcast %cst_6 : f32 to vector<32x128xf32>
    %31 = arith.select %29, %27, %30 : vector<32x128xi1>, vector<32x128xf32>
    %c0_7 = arith.constant 0 : index
    %c0_8 = arith.constant 0 : index
    %c0_9 = arith.constant 0 : index
    %32 = vector.load %arg1[%c0_7, %c0_8, %c0_9] : memref<3x128x128xf32, #tpu.memory_space<vmem>>, vector<1x128x128xf32>
    %33 = vector.shape_cast %32 : vector<1x128x128xf32> to vector<128x128xf32>
    %cst_10 = arith.constant dense<0.000000e+00> : vector<32x128xf32>
    %34 = tpu.matmul %26, %33, %cst_10 {dimension_numbers = #tpu.dot_dimension_numbers<[1], [0], [0], [1], [0, 0, 1, 1], [], []>} : vector<32x128xf32>, vector<128x128xf32>, vector<32x128xf32> -> vector<32x128xf32>
    %c1 = arith.constant 1 : index
    %c0_11 = arith.constant 0 : index
    %c0_12 = arith.constant 0 : index
    %35 = vector.load %arg1[%c1, %c0_11, %c0_12] : memref<3x128x128xf32, #tpu.memory_space<vmem>>, vector<1x128x128xf32>
    %36 = vector.shape_cast %35 : vector<1x128x128xf32> to vector<128x128xf32>
    %cst_13 = arith.constant dense<0.000000e+00> : vector<32x128xf32>
    %37 = tpu.matmul %21, %36, %cst_13 {dimension_numbers = #tpu.dot_dimension_numbers<[1], [0], [0], [1], [0, 0, 1, 1], [], []>} : vector<32x128xf32>, vector<128x128xf32>, vector<32x128xf32> -> vector<32x128xf32>
    %38 = arith.addf %34, %37 : vector<32x128xf32>
    %c2 = arith.constant 2 : index
    %c0_14 = arith.constant 0 : index
    %c0_15 = arith.constant 0 : index
    %39 = vector.load %arg1[%c2, %c0_14, %c0_15] : memref<3x128x128xf32, #tpu.memory_space<vmem>>, vector<1x128x128xf32>
    %40 = vector.shape_cast %39 : vector<1x128x128xf32> to vector<128x128xf32>
    %cst_16 = arith.constant dense<0.000000e+00> : vector<32x128xf32>
    %41 = tpu.matmul %31, %40, %cst_16 {dimension_numbers = #tpu.dot_dimension_numbers<[1], [0], [0], [1], [0, 0, 1, 1], [], []>} : vector<32x128xf32>, vector<128x128xf32>, vector<32x128xf32> -> vector<32x128xf32>
    %42 = arith.addf %38, %41 : vector<32x128xf32>
    %c0_17 = arith.constant 0 : index
    %c0_18 = arith.constant 0 : index
    %43 = vector.load %arg2[%c0_17, %c0_18] : memref<1x128xf32, #tpu.memory_space<vmem>>, vector<1x128xf32>
    %c0_19 = arith.constant 0 : index
    %c0_20 = arith.constant 0 : index
    %44 = vector.load %arg3[%c0_19, %c0_20] : memref<1x128xf32, #tpu.memory_space<vmem>>, vector<1x128xf32>
    %cst_21 = arith.constant dense<0.000000e+00> : vector<128xf32>
    %45 = vector.multi_reduction <add>, %42, %cst_21 [0] : vector<32x128xf32> to vector<128xf32>
    %46 = vector.shape_cast %45 : vector<128xf32> to vector<1x128xf32>
    %c8_i32 = arith.constant 8 : i32
    %47 = tpu.dynamic_rotate %46 by %c8_i32 dim 1 : vector<1x128xf32>, i32 -> vector<1x128xf32>
    %48 = arith.addf %46, %47 : vector<1x128xf32>
    %c16_i32_22 = arith.constant 16 : i32
    %49 = tpu.dynamic_rotate %48 by %c16_i32_22 dim 1 : vector<1x128xf32>, i32 -> vector<1x128xf32>
    %50 = arith.addf %48, %49 : vector<1x128xf32>
    %c32_i32 = arith.constant 32 : i32
    %51 = tpu.dynamic_rotate %50 by %c32_i32 dim 1 : vector<1x128xf32>, i32 -> vector<1x128xf32>
    %52 = arith.addf %50, %51 : vector<1x128xf32>
    %c64_i32 = arith.constant 64 : i32
    %53 = tpu.dynamic_rotate %52 by %c64_i32 dim 1 : vector<1x128xf32>, i32 -> vector<1x128xf32>
    %54 = arith.addf %52, %53 : vector<1x128xf32>
    %cst_23 = arith.constant 0.001953125 : f32
    %55 = vector.broadcast %cst_23 : f32 to vector<1x128xf32>
    %56 = arith.mulf %54, %55 : vector<1x128xf32>
    %57 = vector.broadcast %56 : vector<1x128xf32> to vector<32x128xf32>
    %58 = arith.subf %42, %57 : vector<32x128xf32>
    %59 = arith.mulf %58, %58 : vector<32x128xf32>
    %cst_24 = arith.constant dense<0.000000e+00> : vector<128xf32>
    %60 = vector.multi_reduction <add>, %59, %cst_24 [0] : vector<32x128xf32> to vector<128xf32>
    %61 = vector.shape_cast %60 : vector<128xf32> to vector<1x128xf32>
    %c8_i32_25 = arith.constant 8 : i32
    %62 = tpu.dynamic_rotate %61 by %c8_i32_25 dim 1 : vector<1x128xf32>, i32 -> vector<1x128xf32>
    %63 = arith.addf %61, %62 : vector<1x128xf32>
    %c16_i32_26 = arith.constant 16 : i32
    %64 = tpu.dynamic_rotate %63 by %c16_i32_26 dim 1 : vector<1x128xf32>, i32 -> vector<1x128xf32>
    %65 = arith.addf %63, %64 : vector<1x128xf32>
    %c32_i32_27 = arith.constant 32 : i32
    %66 = tpu.dynamic_rotate %65 by %c32_i32_27 dim 1 : vector<1x128xf32>, i32 -> vector<1x128xf32>
    %67 = arith.addf %65, %66 : vector<1x128xf32>
    %c64_i32_28 = arith.constant 64 : i32
    %68 = tpu.dynamic_rotate %67 by %c64_i32_28 dim 1 : vector<1x128xf32>, i32 -> vector<1x128xf32>
    %69 = arith.addf %67, %68 : vector<1x128xf32>
    %cst_29 = arith.constant 0.001953125 : f32
    %70 = vector.broadcast %cst_29 : f32 to vector<1x128xf32>
    %71 = arith.mulf %69, %70 : vector<1x128xf32>
    %cst_30 = arith.constant 9.99999974E-6 : f32
    %72 = vector.broadcast %cst_30 : f32 to vector<1x128xf32>
    %73 = arith.addf %71, %72 : vector<1x128xf32>
    %74 = math.rsqrt %73 : vector<1x128xf32>
    %75 = arith.mulf %74, %43 : vector<1x128xf32>
    %76 = vector.broadcast %75 : vector<1x128xf32> to vector<32x128xf32>
    %77 = arith.mulf %58, %76 : vector<32x128xf32>
    %78 = vector.broadcast %44 : vector<1x128xf32> to vector<32x128xf32>
    %79 = arith.addf %77, %78 : vector<32x128xf32>
    %cst_31 = arith.constant 0.000000e+00 : f32
    %80 = vector.broadcast %cst_31 : f32 to vector<32x128xf32>
    %81 = arith.maximumf %79, %80 : vector<32x128xf32>
    %c1_i32_32 = arith.constant 1 : i32
    %82 = tpu.dynamic_rotate %81 by %c1_i32_32 dim 0 : vector<32x128xf32>, i32 -> vector<32x128xf32>
    %cst_33 = arith.constant 0.000000e+00 : f32
    %83 = vector.shape_cast %18 : vector<32x1xi1> to vector<32x1xi1>
    %84 = vector.broadcast %83 : vector<32x1xi1> to vector<32x128xi1>
    %85 = vector.broadcast %cst_33 : f32 to vector<32x128xf32>
    %86 = arith.select %84, %82, %85 : vector<32x128xi1>, vector<32x128xf32>
    %c31_i32_34 = arith.constant 31 : i32
    %87 = tpu.dynamic_rotate %81 by %c31_i32_34 dim 0 : vector<32x128xf32>, i32 -> vector<32x128xf32>
    %cst_35 = arith.constant 0.000000e+00 : f32
    %88 = vector.shape_cast %20 : vector<32x1xi1> to vector<32x1xi1>
    %89 = vector.broadcast %88 : vector<32x1xi1> to vector<32x128xi1>
    %90 = vector.broadcast %cst_35 : f32 to vector<32x128xf32>
    %91 = arith.select %89, %87, %90 : vector<32x128xi1>, vector<32x128xf32>
    %c0_36 = arith.constant 0 : index
    %c0_37 = arith.constant 0 : index
    %c0_38 = arith.constant 0 : index
    %92 = vector.load %arg4[%c0_36, %c0_37, %c0_38] : memref<3x128x128xf32, #tpu.memory_space<vmem>>, vector<1x128x128xf32>
    %93 = vector.shape_cast %92 : vector<1x128x128xf32> to vector<128x128xf32>
    %cst_39 = arith.constant dense<0.000000e+00> : vector<32x128xf32>
    %94 = tpu.matmul %86, %93, %cst_39 {dimension_numbers = #tpu.dot_dimension_numbers<[1], [0], [0], [1], [0, 0, 1, 1], [], []>} : vector<32x128xf32>, vector<128x128xf32>, vector<32x128xf32> -> vector<32x128xf32>
    %c1_40 = arith.constant 1 : index
    %c0_41 = arith.constant 0 : index
    %c0_42 = arith.constant 0 : index
    %95 = vector.load %arg4[%c1_40, %c0_41, %c0_42] : memref<3x128x128xf32, #tpu.memory_space<vmem>>, vector<1x128x128xf32>
    %96 = vector.shape_cast %95 : vector<1x128x128xf32> to vector<128x128xf32>
    %cst_43 = arith.constant dense<0.000000e+00> : vector<32x128xf32>
    %97 = tpu.matmul %81, %96, %cst_43 {dimension_numbers = #tpu.dot_dimension_numbers<[1], [0], [0], [1], [0, 0, 1, 1], [], []>} : vector<32x128xf32>, vector<128x128xf32>, vector<32x128xf32> -> vector<32x128xf32>
    %98 = arith.addf %94, %97 : vector<32x128xf32>
    %c2_44 = arith.constant 2 : index
    %c0_45 = arith.constant 0 : index
    %c0_46 = arith.constant 0 : index
    %99 = vector.load %arg4[%c2_44, %c0_45, %c0_46] : memref<3x128x128xf32, #tpu.memory_space<vmem>>, vector<1x128x128xf32>
    %100 = vector.shape_cast %99 : vector<1x128x128xf32> to vector<128x128xf32>
    %cst_47 = arith.constant dense<0.000000e+00> : vector<32x128xf32>
    %101 = tpu.matmul %91, %100, %cst_47 {dimension_numbers = #tpu.dot_dimension_numbers<[1], [0], [0], [1], [0, 0, 1, 1], [], []>} : vector<32x128xf32>, vector<128x128xf32>, vector<32x128xf32> -> vector<32x128xf32>
    %102 = arith.addf %98, %101 : vector<32x128xf32>
    %c0_48 = arith.constant 0 : index
    %c0_49 = arith.constant 0 : index
    %103 = vector.load %arg5[%c0_48, %c0_49] : memref<1x128xf32, #tpu.memory_space<vmem>>, vector<1x128xf32>
    %c0_50 = arith.constant 0 : index
    %c0_51 = arith.constant 0 : index
    %104 = vector.load %arg6[%c0_50, %c0_51] : memref<1x128xf32, #tpu.memory_space<vmem>>, vector<1x128xf32>
    %cst_52 = arith.constant dense<0.000000e+00> : vector<128xf32>
    %105 = vector.multi_reduction <add>, %102, %cst_52 [0] : vector<32x128xf32> to vector<128xf32>
    %106 = vector.shape_cast %105 : vector<128xf32> to vector<1x128xf32>
    %c8_i32_53 = arith.constant 8 : i32
    %107 = tpu.dynamic_rotate %106 by %c8_i32_53 dim 1 : vector<1x128xf32>, i32 -> vector<1x128xf32>
    %108 = arith.addf %106, %107 : vector<1x128xf32>
    %c16_i32_54 = arith.constant 16 : i32
    %109 = tpu.dynamic_rotate %108 by %c16_i32_54 dim 1 : vector<1x128xf32>, i32 -> vector<1x128xf32>
    %110 = arith.addf %108, %109 : vector<1x128xf32>
    %c32_i32_55 = arith.constant 32 : i32
    %111 = tpu.dynamic_rotate %110 by %c32_i32_55 dim 1 : vector<1x128xf32>, i32 -> vector<1x128xf32>
    %112 = arith.addf %110, %111 : vector<1x128xf32>
    %c64_i32_56 = arith.constant 64 : i32
    %113 = tpu.dynamic_rotate %112 by %c64_i32_56 dim 1 : vector<1x128xf32>, i32 -> vector<1x128xf32>
    %114 = arith.addf %112, %113 : vector<1x128xf32>
    %cst_57 = arith.constant 0.001953125 : f32
    %115 = vector.broadcast %cst_57 : f32 to vector<1x128xf32>
    %116 = arith.mulf %114, %115 : vector<1x128xf32>
    %117 = vector.broadcast %116 : vector<1x128xf32> to vector<32x128xf32>
    %118 = arith.subf %102, %117 : vector<32x128xf32>
    %119 = arith.mulf %118, %118 : vector<32x128xf32>
    %cst_58 = arith.constant dense<0.000000e+00> : vector<128xf32>
    %120 = vector.multi_reduction <add>, %119, %cst_58 [0] : vector<32x128xf32> to vector<128xf32>
    %121 = vector.shape_cast %120 : vector<128xf32> to vector<1x128xf32>
    %c8_i32_59 = arith.constant 8 : i32
    %122 = tpu.dynamic_rotate %121 by %c8_i32_59 dim 1 : vector<1x128xf32>, i32 -> vector<1x128xf32>
    %123 = arith.addf %121, %122 : vector<1x128xf32>
    %c16_i32_60 = arith.constant 16 : i32
    %124 = tpu.dynamic_rotate %123 by %c16_i32_60 dim 1 : vector<1x128xf32>, i32 -> vector<1x128xf32>
    %125 = arith.addf %123, %124 : vector<1x128xf32>
    %c32_i32_61 = arith.constant 32 : i32
    %126 = tpu.dynamic_rotate %125 by %c32_i32_61 dim 1 : vector<1x128xf32>, i32 -> vector<1x128xf32>
    %127 = arith.addf %125, %126 : vector<1x128xf32>
    %c64_i32_62 = arith.constant 64 : i32
    %128 = tpu.dynamic_rotate %127 by %c64_i32_62 dim 1 : vector<1x128xf32>, i32 -> vector<1x128xf32>
    %129 = arith.addf %127, %128 : vector<1x128xf32>
    %cst_63 = arith.constant 0.001953125 : f32
    %130 = vector.broadcast %cst_63 : f32 to vector<1x128xf32>
    %131 = arith.mulf %129, %130 : vector<1x128xf32>
    %cst_64 = arith.constant 9.99999974E-6 : f32
    %132 = vector.broadcast %cst_64 : f32 to vector<1x128xf32>
    %133 = arith.addf %131, %132 : vector<1x128xf32>
    %134 = math.rsqrt %133 : vector<1x128xf32>
    %135 = arith.mulf %134, %103 : vector<1x128xf32>
    %136 = vector.broadcast %135 : vector<1x128xf32> to vector<32x128xf32>
    %137 = arith.mulf %118, %136 : vector<32x128xf32>
    %138 = vector.broadcast %104 : vector<1x128xf32> to vector<32x128xf32>
    %139 = arith.addf %137, %138 : vector<32x128xf32>
    %cst_65 = arith.constant 0.000000e+00 : f32
    %140 = vector.broadcast %cst_65 : f32 to vector<32x128xf32>
    %141 = arith.maximumf %139, %140 : vector<32x128xf32>
    %c0_66 = arith.constant 0 : index
    %c0_67 = arith.constant 0 : index
    %142 = vector.load %arg7[%c0_66, %c0_67] : memref<32x128xf32, #tpu.memory_space<vmem>>, vector<32x128xf32>
    tpu.vector_store %arg7[%c0_66, %c0_67], %141 {strides = array<i32>} : memref<32x128xf32, #tpu.memory_space<vmem>>, vector<32x128xf32>,
    return
  }
}

</mosaic_0001>

<llo_original>
// kernel: tpu_custom_call.1
$region0: #{tpu_custom_call.1}
  #allocation0 [shape = 'u32[]', space=smem, size = 0x4, offset = 0x4, fixed_abs, tag = 'smem constant byte address 0x4 - core index']
  #allocation1 [shape = 'u32[144,128]{1,0:T(1,128)}', space=vmem, size = 0x12000, scoped, tag = 'internal scratch']
  %s0 = inlined_call_operand.hbm [shape: f32[32,128], index: 0, kind: input, shape index: {}]
  %s1 = inlined_call_operand.hbm [shape: f32[3,128,128], index: 1, kind: input, shape index: {}]
  %s2 = inlined_call_operand.vmem [shape: f32[1,128], index: 2, kind: input, shape index: {}]
  %s3 = inlined_call_operand.vmem [shape: f32[1,128], index: 3, kind: input, shape index: {}]
  %s4 = inlined_call_operand.hbm [shape: f32[3,128,128], index: 4, kind: input, shape index: {}]
  %s5 = inlined_call_operand.vmem [shape: f32[1,128], index: 5, kind: input, shape index: {}]
  %s6 = inlined_call_operand.vmem [shape: f32[1,128], index: 6, kind: input, shape index: {}]
  %s7 = inlined_call_operand.hbm [shape: f32[32,128], index: 7, kind: output, shape index: {}]
  %s8 = sld [smem:[#allocation0]]
  $region50: #{tpu_custom_call.1} parent=0
    _
  %s10 = ssub.s32 1, %s8
  %s11 = scalar_select 0, %s10, %s8
  $region1: #{tpu_custom_call.1} parent=0
    #allocation2 [shape = 'u8[16384]{0}', space=vmem, size = 0x4000, scoped, tag = 'input window, operand 0, single buffered']
    #allocation3 [shape = 's32[1]{0}', space=sflag, size = 0x4, scoped, tag = 'scoped memory for tpu_custom_call.1']
    #allocation4 [shape = 's32[1]{0}', space=sflag, size = 0x4, scoped, tag = 'scoped memory for tpu_custom_call.1']
    #allocation5 [shape = 'u8[196608]{0}', space=vmem, size = 0x30000, scoped, tag = 'input window, operand 1, single buffered']
    #allocation6 [shape = 's32[1]{0}', space=sflag, size = 0x4, scoped, tag = 'scoped memory for tpu_custom_call.1']
    #allocation7 [shape = 'u8[196608]{0}', space=vmem, size = 0x30000, scoped, tag = 'input window, operand 4, single buffered']
    #allocation8 [shape = 'u8[16384]{0}', space=vmem, size = 0x4000, scoped, tag = 'output window, operand 0, single buffered']
    %12 = vsyncpa [#allocation3], 0
    %13 = vsyncpa [#allocation6], 0
    %14 = vsyncpa [#allocation4], 0
    // Predicated region
    $region2: #{tpu_custom_call.1} parent=1 // pred_check
      _
    $region3: #{tpu_custom_call.1} parent=1 // pred_check_branch
      %16 = sbr.rel (0) target = $region5
    $region4: #{tpu_custom_call.1} parent=1 // pred_region
      %s18 = ssub.s32 512, 512
      %19 = vsyncadd [#allocation3], %s18
      %s20 = sshll.u32 [#allocation2], 4
      %s21 = int_to_ptr.vmem [resolvable:$true] %s20
      %26 = dma.hbm_to_vmem [thread:$0]  %s0, 512, %s21, [#allocation3], 128, 128, 8
    $region5: #{tpu_custom_call.1} parent=1 // pred_fallthru
      _
    // Predicated region
    $region6: #{tpu_custom_call.1} parent=1 // pred_check
      _
    $region7: #{tpu_custom_call.1} parent=1 // pred_check_branch
      %28 = sbr.rel (0) target = $region9
    $region8: #{tpu_custom_call.1} parent=1 // pred_region
      %s30 = ssub.s32 6144, 6144
      %31 = vsyncadd [#allocation6], %s30
      %s32 = sshll.u32 [#allocation5], 4
      %s33 = int_to_ptr.vmem [resolvable:$true] %s32
      %38 = dma.hbm_to_vmem [thread:$0]  %s1, 6144, %s33, [#allocation6], 128, 128, 8
    $region9: #{tpu_custom_call.1} parent=1 // pred_fallthru
      _
    // Predicated region
    $region10: #{tpu_custom_call.1} parent=1 // pred_check
      _
    $region11: #{tpu_custom_call.1} parent=1 // pred_check_branch
      %40 = sbr.rel (0) target = $region13
    $region12: #{tpu_custom_call.1} parent=1 // pred_region
      _
    $region13: #{tpu_custom_call.1} parent=1 // pred_fallthru
      _
    // Predicated region
    $region14: #{tpu_custom_call.1} parent=1 // pred_check
      _
    $region15: #{tpu_custom_call.1} parent=1 // pred_check_branch
      %42 = sbr.rel (0) target = $region17
    $region16: #{tpu_custom_call.1} parent=1 // pred_region
      _
    $region17: #{tpu_custom_call.1} parent=1 // pred_fallthru
      _
    // Predicated region
    $region18: #{tpu_custom_call.1} parent=1 // pred_check
      _
    $region19: #{tpu_custom_call.1} parent=1 // pred_check_branch
      %44 = sbr.rel (0) target = $region21
    $region20: #{tpu_custom_call.1} parent=1 // pred_region
      %s46 = ssub.s32 6144, 6144
      %47 = vsyncadd [#allocation6], %s46
      %s48 = sshll.u32 [#allocation7], 4
      %s49 = int_to_ptr.vmem [resolvable:$true] %s48
      %54 = dma.hbm_to_vmem [thread:$0]  %s4, 6144, %s49, [#allocation6], 128, 128, 8
    $region21: #{tpu_custom_call.1} parent=1 // pred_fallthru
      _
    // Predicated region
    $region22: #{tpu_custom_call.1} parent=1 // pred_check
      _
    $region23: #{tpu_custom_call.1} parent=1 // pred_check_branch
      %56 = sbr.rel (0) target = $region25
    $region24: #{tpu_custom_call.1} parent=1 // pred_region
      _
    $region25: #{tpu_custom_call.1} parent=1 // pred_fallthru
      _
    // Predicated region
    $region26: #{tpu_custom_call.1} parent=1 // pred_check
      _
    $region27: #{tpu_custom_call.1} parent=1 // pred_check_branch
      %58 = sbr.rel (0) target = $region29
    $region28: #{tpu_custom_call.1} parent=1 // pred_region
      _
    $region29: #{tpu_custom_call.1} parent=1 // pred_fallthru
      _
    // Predicated region
    $region30: #{tpu_custom_call.1} parent=1 // pred_check
      _
    $region31: #{tpu_custom_call.1} parent=1 // pred_check_branch
      %60 = sbr.rel (0) target = $region33
    $region32: #{tpu_custom_call.1} parent=1 // pred_region
      %61 = dma.done [#allocation3], 512
    $region33: #{tpu_custom_call.1} parent=1 // pred_fallthru
      _
    // Predicated region
    $region34: #{tpu_custom_call.1} parent=1 // pred_check
      _
    $region35: #{tpu_custom_call.1} parent=1 // pred_check_branch
      %63 = sbr.rel (0) target = $region37
    $region36: #{tpu_custom_call.1} parent=1 // pred_region
      %64 = dma.done [#allocation6], 6144
    $region37: #{tpu_custom_call.1} parent=1 // pred_fallthru
      _
    // Predicated region
    $region38: #{tpu_custom_call.1} parent=1 // pred_check
      _
    $region39: #{tpu_custom_call.1} parent=1 // pred_check_branch
      %66 = sbr.rel (0) target = $region41
    $region40: #{tpu_custom_call.1} parent=1 // pred_region
      %67 = dma.done [#allocation6], 6144
    $region41: #{tpu_custom_call.1} parent=1 // pred_fallthru
      _
    %v68 = vlaneseq
    %v69 = vshrl.u32 %v68, 7
    %v70 = vadd.s32 %v69, 8
    %v71 = vadd.s32 %v69, 16
    %v72 = vadd.s32 %v69, 24
    %vm73 = vcmp.lt.s32.totalorder %v69, 0
    %v74 = vsub.s32 0, %v69
    %v75 = vsel %vm73, %v74, %v69
    %v76 = vshrl.u32 %v75, 4
    %v77 = vand.u32 %v75, 15
    %v78 = vsub.s32 0, %v77
    %v79 = vsel %vm73, %v78, %v77
    %vm80 = vcmp.lt.s32.totalorder %v70, 0
    %v81 = vsub.s32 0, %v70
    %v82 = vsel %vm80, %v81, %v70
    %v83 = vshrl.u32 %v82, 4
    %v84 = vand.u32 %v82, 15
    %v85 = vsub.s32 0, %v84
    %v86 = vsel %vm80, %v85, %v84
    %vm87 = vcmp.lt.s32.totalorder %v71, 0
    %v88 = vsub.s32 0, %v71
    %v89 = vsel %vm87, %v88, %v71
    %v90 = vshrl.u32 %v89, 4
    %v91 = vand.u32 %v89, 15
    %v92 = vsub.s32 0, %v91
    %v93 = vsel %vm87, %v92, %v91
    %vm94 = vcmp.lt.s32.totalorder %v72, 0
    %v95 = vsub.s32 0, %v72
    %v96 = vsel %vm94, %v95, %v72
    %v97 = vshrl.u32 %v96, 4
    %v98 = vand.u32 %v96, 15
    %v99 = vsub.s32 0, %v98
    %v100 = vsel %vm94, %v99, %v98
    %vm101 = vcmp.ne.s32.totalorder %v79, 0
    %vm102 = vcmp.ne.s32.totalorder %v86, 0
    %vm103 = vcmp.ne.s32.totalorder %v93, 0
    %vm104 = vcmp.ne.s32.totalorder %v100, 0
    %vm105 = vcmp.lt.s32.totalorder %v79, 0
    %vm106 = vcmp.lt.s32.totalorder %v86, 0
    %vm107 = vcmp.lt.s32.totalorder %v93, 0
    %vm108 = vcmp.lt.s32.totalorder %v100, 0
    %vm109 = vmand %vm105, %vm101
    %vm110 = vmand %vm106, %vm102
    %vm111 = vmand %vm107, %vm103
    %vm112 = vmand %vm108, %vm104
    %v113 = vadd.s32 %v79, 16
    %v114 = vadd.s32 %v86, 16
    %v115 = vadd.s32 %v93, 16
    %v116 = vadd.s32 %v100, 16
    %v117 = vsel %vm109, %v113, %v79
    %v118 = vsel %vm110, %v114, %v86
    %v119 = vsel %vm111, %v115, %v93
    %v120 = vsel %vm112, %v116, %v100
    %vm121 = vcmp.gt.s32.totalorder %v117, 0
    %vm122 = vcmp.gt.s32.totalorder %v118, 0
    %vm123 = vcmp.gt.s32.totalorder %v119, 0
    %vm124 = vcmp.gt.s32.totalorder %v120, 0
    %vm125 = vcmp.lt.s32.totalorder %v117, 15
    %vm126 = vcmp.lt.s32.totalorder %v118, 15
    %vm127 = vcmp.lt.s32.totalorder %v119, 15
    %vm128 = vcmp.lt.s32.totalorder %v120, 15
    %v129 = vld [vmem:[#allocation2] sm:$0xff]
    %v130 = vld [vmem:[#allocation2 + $0x8] sm:$0xff]
    %v131 = vld [vmem:[#allocation2 + $0x10] sm:$0xff]
    %v132 = vld [vmem:[#allocation2 + $0x18] sm:$0xff]
    %v133 = vrot.slane %v129, 7
    %v134 = vrot.slane %v130, 7
    %v135 = vrot.slane %v131, 7
    %v136 = vrot.slane %v132, 7
    %vm137 = vcmp.lt.s32.totalorder %v69, 1
    %v138 = vsel %vm137, %v135, %v136
    %v139 = vsel %vm137, %v134, %v135
    %v140 = vsel %vm137, %v133, %v134
    %v141 = vsel %vm137, %v136, %v133
    %v142 = vsel %vm121, 1, 0
    %v143 = vsel %vm122, 1, 0
    %v144 = vsel %vm123, 1, 0
    %v145 = vsel %vm124, 1, 0
    %vm146 = vcmp.eq.s32.totalorder %v142, 1
    %vm147 = vcmp.eq.s32.totalorder %v143, 1
    %vm148 = vcmp.eq.s32.totalorder %v144, 1
    %vm149 = vcmp.eq.s32.totalorder %v145, 1
    %v150 = vsel %vm146, %v141, 0.0
    %v151 = vsel %vm147, %v140, 0.0
    %v152 = vsel %vm148, %v139, 0.0
    %v153 = vsel %vm149, %v138, 0.0
    %v154 = vrot.slane %v129, 1
    %v155 = vrot.slane %v130, 1
    %v156 = vrot.slane %v131, 1
    %v157 = vrot.slane %v132, 1
    %vm158 = vcmp.lt.s32.totalorder %v69, 7
    %v159 = vsel %vm158, %v156, %v157
    %v160 = vsel %vm158, %v155, %v156
    %v161 = vsel %vm158, %v154, %v155
    %v162 = vsel %vm158, %v157, %v154
    %v163 = vsel %vm125, 1, 0
    %v164 = vsel %vm126, 1, 0
    %v165 = vsel %vm127, 1, 0
    %v166 = vsel %vm128, 1, 0
    %vm167 = vcmp.eq.s32.totalorder %v163, 1
    %vm168 = vcmp.eq.s32.totalorder %v164, 1
    %vm169 = vcmp.eq.s32.totalorder %v165, 1
    %vm170 = vcmp.eq.s32.totalorder %v166, 1
    %v171 = vsel %vm167, %v161, 0.0
    %v172 = vsel %vm168, %v160, 0.0
    %v173 = vsel %vm169, %v159, 0.0
    %v174 = vsel %vm170, %v162, 0.0
    %v175 = vld [vmem:[#allocation5] sm:$0xff]
    %v176 = vld [vmem:[#allocation5 + $0x8] sm:$0xff]
    %v177 = vld [vmem:[#allocation5 + $0x10] sm:$0xff]
    %v178 = vld [vmem:[#allocation5 + $0x18] sm:$0xff]
    %v179 = vld [vmem:[#allocation5 + $0x20] sm:$0xff]
    %v180 = vld [vmem:[#allocation5 + $0x28] sm:$0xff]
    %v181 = vld [vmem:[#allocation5 + $0x30] sm:$0xff]
    %v182 = vld [vmem:[#allocation5 + $0x38] sm:$0xff]
    %v183 = vld [vmem:[#allocation5 + $0x40] sm:$0xff]
    %v184 = vld [vmem:[#allocation5 + $0x48] sm:$0xff]
    %v185 = vld [vmem:[#allocation5 + $0x50] sm:$0xff]
    %v186 = vld [vmem:[#allocation5 + $0x58] sm:$0xff]
    %v187 = vld [vmem:[#allocation5 + $0x60] sm:$0xff]
    %v188 = vld [vmem:[#allocation5 + $0x68] sm:$0xff]
    %v189 = vld [vmem:[#allocation5 + $0x70] sm:$0xff]
    %v190 = vld [vmem:[#allocation5 + $0x78] sm:$0xff]
    %s191 = scalar_lea.vmem [#allocation5], 128
    %v192 = vld [vmem:[%s191] sm:$0xff]
    %v193 = vld [vmem:[%s191 + $0x8] sm:$0xff]
    %v194 = vld [vmem:[%s191 + $0x10] sm:$0xff]
    %v195 = vld [vmem:[%s191 + $0x18] sm:$0xff]
    %v196 = vld [vmem:[%s191 + $0x20] sm:$0xff]
    %v197 = vld [vmem:[%s191 + $0x28] sm:$0xff]
    %v198 = vld [vmem:[%s191 + $0x30] sm:$0xff]
    %v199 = vld [vmem:[%s191 + $0x38] sm:$0xff]
    %v200 = vld [vmem:[%s191 + $0x40] sm:$0xff]
    %v201 = vld [vmem:[%s191 + $0x48] sm:$0xff]
    %v202 = vld [vmem:[%s191 + $0x50] sm:$0xff]
    %v203 = vld [vmem:[%s191 + $0x58] sm:$0xff]
    %v204 = vld [vmem:[%s191 + $0x60] sm:$0xff]
    %v205 = vld [vmem:[%s191 + $0x68] sm:$0xff]
    %v206 = vld [vmem:[%s191 + $0x70] sm:$0xff]
    %v207 = vld [vmem:[%s191 + $0x78] sm:$0xff]
    %208 = vmatprep.subr.mxu0 0.0
    %209 = vmatpush1.msra.mxu0 %v192
    %210 = vmatprep.subr.mxu0 0.0
    %211 = vmatpush1.msra.mxu0 %v193
    %212 = vmatprep.subr.mxu0 0.0
    %213 = vmatpush1.msra.mxu0 %v194
    %214 = vmatprep.subr.mxu0 0.0
    %215 = vmatpush1.msra.mxu0 %v195
    %216 = vmatprep.subr.mxu0 0.0
    %217 = vmatpush1.msra.mxu0 %v196
    %218 = vmatprep.subr.mxu0 0.0
    %219 = vmatpush1.msra.mxu0 %v197
    %220 = vmatprep.subr.mxu0 0.0
    %221 = vmatpush1.msra.mxu0 %v198
    %222 = vmatprep.subr.mxu0 0.0
    %223 = vmatpush1.msra.mxu0 %v199
    %224 = vmatprep.subr.mxu0 0.0
    %225 = vmatpush1.msra.mxu0 %v200
    %226 = vmatprep.subr.mxu0 0.0
    %227 = vmatpush1.msra.mxu0 %v201
    %228 = vmatprep.subr.mxu0 0.0
    %229 = vmatpush1.msra.mxu0 %v202
    %230 = vmatprep.subr.mxu0 0.0
    %231 = vmatpush1.msra.mxu0 %v203
    %232 = vmatprep.subr.mxu0 0.0
    %233 = vmatpush1.msra.mxu0 %v204
    %234 = vmatprep.subr.mxu0 0.0
    %235 = vmatpush1.msra.mxu0 %v205
    %236 = vmatprep.subr.mxu0 0.0
    %237 = vmatpush1.msra.mxu0 %v206
    %238 = vmatprep.subr.mxu0 0.0
    %239 = vmatpush1.msra.mxu0 %v207
    %240 = vmatprep.subr.mxu0 0.0
    %241 = vmatpush1.msra.mxu0 0.0
    %242 = vmatprep.subr.mxu0 0.0
    %243 = vmatpush1.msra.mxu0 0.0
    %244 = vmatprep.subr.mxu0 0.0
    %245 = vmatpush1.msra.mxu0 0.0
    %246 = vmatprep.subr.mxu0 0.0
    %247 = vmatpush1.msra.mxu0 0.0
    %248 = vmatprep.subr.mxu0 0.0
    %249 = vmatpush1.msra.mxu0 0.0
    %250 = vmatprep.subr.mxu0 0.0
    %251 = vmatpush1.msra.mxu0 0.0
    %252 = vmatprep.subr.mxu0 0.0
    %253 = vmatpush1.msra.mxu0 0.0
    %254 = vmatprep.subr.mxu0 0.0
    %255 = vmatpush1.msra.mxu0 0.0
    %256 = vmatprep.subr.mxu0 0.0
    %257 = vmatpush1.msra.mxu0 0.0
    %258 = vmatprep.subr.mxu0 0.0
    %259 = vmatpush1.msra.mxu0 0.0
    %260 = vmatprep.subr.mxu0 0.0
    %261 = vmatpush1.msra.mxu0 0.0
    %262 = vmatprep.subr.mxu0 0.0
    %263 = vmatpush1.msra.mxu0 0.0
    %264 = vmatprep.subr.mxu0 0.0
    %265 = vmatpush1.msra.mxu0 0.0
    %266 = vmatprep.subr.mxu0 0.0
    %267 = vmatpush1.msra.mxu0 0.0
    %268 = vmatprep.subr.mxu0 0.0
    %269 = vmatpush1.msra.mxu0 0.0
    %270 = vmatprep.subr.mxu0 0.0
    %271 = vmatpush1.msra.mxu0 0.0
    %272 = vmatprep.mubr.f32.mxu0 0.0
    %273 = vmatmul.mubr.f32.gmra.mrb[0].mxu0 %v129
    %v274 = vpop.f32.mrb[0].mxu0
    %v275 = vadd.f32 0.0, %v274
    %v276 = vpop.f32.mrb[0].mxu0
    %277 = vmatprep.mubr.f32.mxu0 0.0
    %278 = vmatmul.mubr.f32.gmra.mrb[0].mxu0 %v130
    %v279 = vpop.f32.mrb[0].mxu0
    %v280 = vadd.f32 0.0, %v279
    %v281 = vpop.f32.mrb[0].mxu0
    %282 = vmatprep.mubr.f32.mxu0 0.0
    %283 = vmatmul.mubr.f32.gmra.mrb[0].mxu0 %v131
    %v284 = vpop.f32.mrb[0].mxu0
    %v285 = vadd.f32 0.0, %v284
    %v286 = vpop.f32.mrb[0].mxu0
    %287 = vmatprep.mubr.f32.mxu0 0.0
    %288 = vmatmul.mubr.f32.gmra.mrb[0].mxu0 %v132
    %v289 = vpop.f32.mrb[0].mxu0
    %v290 = vadd.f32 0.0, %v289
    %v291 = vpop.f32.mrb[0].mxu0
    %292 = vdwg.mxu0
    %293 = vmatprep.subr.mxu0 0.0
    %294 = vmatpush1.msra.mxu0 %v175
    %295 = vmatprep.subr.mxu0 0.0
    %296 = vmatpush1.msra.mxu0 %v176
    %297 = vmatprep.subr.mxu0 0.0
    %298 = vmatpush1.msra.mxu0 %v177
    %299 = vmatprep.subr.mxu0 0.0
    %300 = vmatpush1.msra.mxu0 %v178
    %301 = vmatprep.subr.mxu0 0.0
    %302 = vmatpush1.msra.mxu0 %v179
    %303 = vmatprep.subr.mxu0 0.0
    %304 = vmatpush1.msra.mxu0 %v180
    %305 = vmatprep.subr.mxu0 0.0
    %306 = vmatpush1.msra.mxu0 %v181
    %307 = vmatprep.subr.mxu0 0.0
    %308 = vmatpush1.msra.mxu0 %v182
    %309 = vmatprep.subr.mxu0 0.0
    %310 = vmatpush1.msra.mxu0 %v183
    %311 = vmatprep.subr.mxu0 0.0
    %312 = vmatpush1.msra.mxu0 %v184
    %313 = vmatprep.subr.mxu0 0.0
    %314 = vmatpush1.msra.mxu0 %v185
    %315 = vmatprep.subr.mxu0 0.0
    %316 = vmatpush1.msra.mxu0 %v186
    %317 = vmatprep.subr.mxu0 0.0
    %318 = vmatpush1.msra.mxu0 %v187
    %319 = vmatprep.subr.mxu0 0.0
    %320 = vmatpush1.msra.mxu0 %v188
    %321 = vmatprep.subr.mxu0 0.0
    %322 = vmatpush1.msra.mxu0 %v189
    %323 = vmatprep.subr.mxu0 0.0
    %324 = vmatpush1.msra.mxu0 %v190
    %325 = vmatprep.subr.mxu0 0.0
    %326 = vmatpush1.msra.mxu0 0.0
    %327 = vmatprep.subr.mxu0 0.0
    %328 = vmatpush1.msra.mxu0 0.0
    %329 = vmatprep.subr.mxu0 0.0
    %330 = vmatpush1.msra.mxu0 0.0
    %331 = vmatprep.subr.mxu0 0.0
    %332 = vmatpush1.msra.mxu0 0.0
    %333 = vmatprep.subr.mxu0 0.0
    %334 = vmatpush1.msra.mxu0 0.0
    %335 = vmatprep.subr.mxu0 0.0
    %336 = vmatpush1.msra.mxu0 0.0
    %337 = vmatprep.subr.mxu0 0.0
    %338 = vmatpush1.msra.mxu0 0.0
    %339 = vmatprep.subr.mxu0 0.0
    %340 = vmatpush1.msra.mxu0 0.0
    %341 = vmatprep.subr.mxu0 0.0
    %342 = vmatpush1.msra.mxu0 0.0
    %343 = vmatprep.subr.mxu0 0.0
    %344 = vmatpush1.msra.mxu0 0.0
    %345 = vmatprep.subr.mxu0 0.0
    %346 = vmatpush1.msra.mxu0 0.0
    %347 = vmatprep.subr.mxu0 0.0
    %348 = vmatpush1.msra.mxu0 0.0
    %349 = vmatprep.subr.mxu0 0.0
    %350 = vmatpush1.msra.mxu0 0.0
    %351 = vmatprep.subr.mxu0 0.0
    %352 = vmatpush1.msra.mxu0 0.0
    %353 = vmatprep.subr.mxu0 0.0
    %354 = vmatpush1.msra.mxu0 0.0
    %355 = vmatprep.subr.mxu0 0.0
    %356 = vmatpush1.msra.mxu0 0.0
    %357 = vmatprep.mubr.f32.mxu0 0.0
    %358 = vmatmul.mubr.f32.gmra.mrb[0].mxu0 %v150
    %v359 = vpop.f32.mrb[0].mxu0
    %v360 = vadd.f32 %v275, %v359
    %v361 = vpop.f32.mrb[0].mxu0
    %362 = vmatprep.mubr.f32.mxu0 0.0
    %363 = vmatmul.mubr.f32.gmra.mrb[0].mxu0 %v151
    %v364 = vpop.f32.mrb[0].mxu0
    %v365 = vadd.f32 %v280, %v364
    %v366 = vpop.f32.mrb[0].mxu0
    %367 = vmatprep.mubr.f32.mxu0 0.0
    %368 = vmatmul.mubr.f32.gmra.mrb[0].mxu0 %v152
    %v369 = vpop.f32.mrb[0].mxu0
    %v370 = vadd.f32 %v285, %v369
    %v371 = vpop.f32.mrb[0].mxu0
    %372 = vmatprep.mubr.f32.mxu0 0.0
    %373 = vmatmul.mubr.f32.gmra.mrb[0].mxu0 %v153
    %v374 = vpop.f32.mrb[0].mxu0
    %v375 = vadd.f32 %v290, %v374
    %v376 = vpop.f32.mrb[0].mxu0
    %377 = vdwg.mxu0
    %s378 = scalar_lea.vmem [#allocation5], 256
    %v379 = vld [vmem:[%s378] sm:$0xff]
    %v380 = vld [vmem:[%s378 + $0x8] sm:$0xff]
    %v381 = vld [vmem:[%s378 + $0x10] sm:$0xff]
    %v382 = vld [vmem:[%s378 + $0x18] sm:$0xff]
    %v383 = vld [vmem:[%s378 + $0x20] sm:$0xff]
    %v384 = vld [vmem:[%s378 + $0x28] sm:$0xff]
    %v385 = vld [vmem:[%s378 + $0x30] sm:$0xff]
    %v386 = vld [vmem:[%s378 + $0x38] sm:$0xff]
    %v387 = vld [vmem:[%s378 + $0x40] sm:$0xff]
    %v388 = vld [vmem:[%s378 + $0x48] sm:$0xff]
    %v389 = vld [vmem:[%s378 + $0x50] sm:$0xff]
    %v390 = vld [vmem:[%s378 + $0x58] sm:$0xff]
    %v391 = vld [vmem:[%s378 + $0x60] sm:$0xff]
    %v392 = vld [vmem:[%s378 + $0x68] sm:$0xff]
    %v393 = vld [vmem:[%s378 + $0x70] sm:$0xff]
    %v394 = vld [vmem:[%s378 + $0x78] sm:$0xff]
    %395 = vmatprep.subr.mxu0 0.0
    %396 = vmatpush1.msra.mxu0 %v379
    %397 = vmatprep.subr.mxu0 0.0
    %398 = vmatpush1.msra.mxu0 %v380
    %399 = vmatprep.subr.mxu0 0.0
    %400 = vmatpush1.msra.mxu0 %v381
    %401 = vmatprep.subr.mxu0 0.0
    %402 = vmatpush1.msra.mxu0 %v382
    %403 = vmatprep.subr.mxu0 0.0
    %404 = vmatpush1.msra.mxu0 %v383
    %405 = vmatprep.subr.mxu0 0.0
    %406 = vmatpush1.msra.mxu0 %v384
    %407 = vmatprep.subr.mxu0 0.0
    %408 = vmatpush1.msra.mxu0 %v385
    %409 = vmatprep.subr.mxu0 0.0
    %410 = vmatpush1.msra.mxu0 %v386
    %411 = vmatprep.subr.mxu0 0.0
    %412 = vmatpush1.msra.mxu0 %v387
    %413 = vmatprep.subr.mxu0 0.0
    %414 = vmatpush1.msra.mxu0 %v388
    %415 = vmatprep.subr.mxu0 0.0
    %416 = vmatpush1.msra.mxu0 %v389
    %417 = vmatprep.subr.mxu0 0.0
    %418 = vmatpush1.msra.mxu0 %v390
    %419 = vmatprep.subr.mxu0 0.0
    %420 = vmatpush1.msra.mxu0 %v391
    %421 = vmatprep.subr.mxu0 0.0
    %422 = vmatpush1.msra.mxu0 %v392
    %423 = vmatprep.subr.mxu0 0.0
    %424 = vmatpush1.msra.mxu0 %v393
    %425 = vmatprep.subr.mxu0 0.0
    %426 = vmatpush1.msra.mxu0 %v394
    %427 = vmatprep.subr.mxu0 0.0
    %428 = vmatpush1.msra.mxu0 0.0
    %429 = vmatprep.subr.mxu0 0.0
    %430 = vmatpush1.msra.mxu0 0.0
    %431 = vmatprep.subr.mxu0 0.0
    %432 = vmatpush1.msra.mxu0 0.0
    %433 = vmatprep.subr.mxu0 0.0
    %434 = vmatpush1.msra.mxu0 0.0
    %435 = vmatprep.subr.mxu0 0.0
    %436 = vmatpush1.msra.mxu0 0.0
    %437 = vmatprep.subr.mxu0 0.0
    %438 = vmatpush1.msra.mxu0 0.0
    %439 = vmatprep.subr.mxu0 0.0
    %440 = vmatpush1.msra.mxu0 0.0
    %441 = vmatprep.subr.mxu0 0.0
    %442 = vmatpush1.msra.mxu0 0.0
    %443 = vmatprep.subr.mxu0 0.0
    %444 = vmatpush1.msra.mxu0 0.0
    %445 = vmatprep.subr.mxu0 0.0
    %446 = vmatpush1.msra.mxu0 0.0
    %447 = vmatprep.subr.mxu0 0.0
    %448 = vmatpush1.msra.mxu0 0.0
    %449 = vmatprep.subr.mxu0 0.0
    %450 = vmatpush1.msra.mxu0 0.0
    %451 = vmatprep.subr.mxu0 0.0
    %452 = vmatpush1.msra.mxu0 0.0
    %453 = vmatprep.subr.mxu0 0.0
    %454 = vmatpush1.msra.mxu0 0.0
    %455 = vmatprep.subr.mxu0 0.0
    %456 = vmatpush1.msra.mxu0 0.0
    %457 = vmatprep.subr.mxu0 0.0
    %458 = vmatpush1.msra.mxu0 0.0
    %459 = vmatprep.mubr.f32.mxu0 0.0
    %460 = vmatmul.mubr.f32.gmra.mrb[0].mxu0 %v171
    %v461 = vpop.f32.mrb[0].mxu0
    %v462 = vadd.f32 0.0, %v461
    %v463 = vpop.f32.mrb[0].mxu0
    %464 = vmatprep.mubr.f32.mxu0 0.0
    %465 = vmatmul.mubr.f32.gmra.mrb[0].mxu0 %v172
    %v466 = vpop.f32.mrb[0].mxu0
    %v467 = vadd.f32 0.0, %v466
    %v468 = vpop.f32.mrb[0].mxu0
    %469 = vmatprep.mubr.f32.mxu0 0.0
    %470 = vmatmul.mubr.f32.gmra.mrb[0].mxu0 %v173
    %v471 = vpop.f32.mrb[0].mxu0
    %v472 = vadd.f32 0.0, %v471
    %v473 = vpop.f32.mrb[0].mxu0
    %474 = vmatprep.mubr.f32.mxu0 0.0
    %475 = vmatmul.mubr.f32.gmra.mrb[0].mxu0 %v174
    %v476 = vpop.f32.mrb[0].mxu0
    %v477 = vadd.f32 0.0, %v476
    %v478 = vpop.f32.mrb[0].mxu0
    %479 = vdwg.mxu0
    %v480 = vadd.f32 %v360, %v462
    %v481 = vadd.f32 %v365, %v467
    %v482 = vadd.f32 %v370, %v472
    %v483 = vadd.f32 %v375, %v477
    %v484 = vld [vmem:[%s2] sm:$0x1]
    %v485 = vld [vmem:[%s3] sm:$0x1]
    %v486 = vadd.f32 %v480, %v481
    %v487 = vadd.f32 %v486, %v482
    %v488 = vadd.f32 %v487, %v483
    %v489 = vrot.slane %v488, 4
    %v490 = vadd.f32 %v488, %v489
    %v491 = vrot.slane %v490, 2
    %v492 = vadd.f32 %v490, %v491
    %v493 = vrot.slane %v492, 1
    %v494 = vadd.f32 %v492, %v493
    %495 = vrot.lane.b32.xlu0 %v494, 8
    %v496 = vpop.permute.xlu0 %495
    %v497 = vadd.f32 %v494, %v496
    %498 = vrot.lane.b32.xlu0 %v497, 16
    %v499 = vpop.permute.xlu0 %498
    %v500 = vadd.f32 %v497, %v499
    %501 = vrot.lane.b32.xlu0 %v500, 32
    %v502 = vpop.permute.xlu0 %501
    %v503 = vadd.f32 %v500, %v502
    %504 = vrot.lane.b32.xlu0 %v503, 64
    %v505 = vpop.permute.xlu0 %504
    %v506 = vadd.f32 %v503, %v505
    %v507 = vmul.f32 %v506, 0.001953125
    %v508 = vlaneseq
    %v509 = vshrl.u32 %v508, 7
    %v510 = vsub.s32 0, %v509
    %v511 = vrot.slane %v507, %v510
    %v512 = vsub.f32 %v480, %v511
    %v513 = vsub.f32 %v481, %v511
    %v514 = vsub.f32 %v482, %v511
    %v515 = vsub.f32 %v483, %v511
    %v516 = vmul.f32 %v512, %v512
    %v517 = vmul.f32 %v513, %v513
    %v518 = vmul.f32 %v514, %v514
    %v519 = vmul.f32 %v515, %v515
    %v520 = vadd.f32 %v516, %v517
    %v521 = vadd.f32 %v520, %v518
    %v522 = vadd.f32 %v521, %v519
    %v523 = vrot.slane %v522, 4
    %v524 = vadd.f32 %v522, %v523
    %v525 = vrot.slane %v524, 2
    %v526 = vadd.f32 %v524, %v525
    %v527 = vrot.slane %v526, 1
    %v528 = vadd.f32 %v526, %v527
    %529 = vrot.lane.b32.xlu0 %v528, 8
    %v530 = vpop.permute.xlu0 %529
    %v531 = vadd.f32 %v528, %v530
    %532 = vrot.lane.b32.xlu0 %v531, 16
    %v533 = vpop.permute.xlu0 %532
    %v534 = vadd.f32 %v531, %v533
    %535 = vrot.lane.b32.xlu0 %v534, 32
    %v536 = vpop.permute.xlu0 %535
    %v537 = vadd.f32 %v534, %v536
    %538 = vrot.lane.b32.xlu0 %v537, 64
    %v539 = vpop.permute.xlu0 %538
    %v540 = vadd.f32 %v537, %v539
    %v541 = vmul.f32 %v540, 0.001953125
    %v542 = vadd.f32 %v541, 1e-05
    %v543 = vrsqrt.pop %v542
    %v544 = vmul.f32 %v543, %v484
    %v545 = vlaneseq
    %v546 = vshrl.u32 %v545, 7
    %v547 = vsub.s32 0, %v546
    %v548 = vrot.slane %v544, %v547
    %v549 = vmul.f32 %v512, %v548
    %v550 = vmul.f32 %v513, %v548
    %v551 = vmul.f32 %v514, %v548
    %v552 = vmul.f32 %v515, %v548
    %v554 = vlaneseq
    %v555 = vshrl.u32 %v554, 7
    %v556 = vsub.s32 0, %v555
    %v557 = vrot.slane %v485, %v556
    %v559 = vadd.f32 %v549, %v557
    %v560 = vadd.f32 %v550, %v557
    %v561 = vadd.f32 %v551, %v557
    %v562 = vadd.f32 %v552, %v557
    %v563 = vmax.f32 %v559, 0.0
    %v564 = vmax.f32 %v560, 0.0
    %v565 = vmax.f32 %v561, 0.0
    %v566 = vmax.f32 %v562, 0.0
    %v567 = vrot.slane %v563, 7
    %v568 = vrot.slane %v564, 7
    %v569 = vrot.slane %v565, 7
    %v570 = vrot.slane %v566, 7
    %v571 = vsel %vm137, %v569, %v570
    %v572 = vsel %vm137, %v568, %v569
    %v573 = vsel %vm137, %v567, %v568
    %v574 = vsel %vm137, %v570, %v567
    %v575 = vsel %vm146, %v574, 0.0
    %v576 = vsel %vm147, %v573, 0.0
    %v577 = vsel %vm148, %v572, 0.0
    %v578 = vsel %vm149, %v571, 0.0
    %v579 = vrot.slane %v563, 1
    %v580 = vrot.slane %v564, 1
    %v581 = vrot.slane %v565, 1
    %v582 = vrot.slane %v566, 1
    %v583 = vsel %vm158, %v581, %v582
    %v584 = vsel %vm158, %v580, %v581
    %v585 = vsel %vm158, %v579, %v580
    %v586 = vsel %vm158, %v582, %v579
    %v587 = vsel %vm167, %v585, 0.0
    %v588 = vsel %vm168, %v584, 0.0
    %v589 = vsel %vm169, %v583, 0.0
    %v590 = vsel %vm170, %v586, 0.0
    %v591 = vld [vmem:[#allocation7] sm:$0xff]
    %v592 = vld [vmem:[#allocation7 + $0x8] sm:$0xff]
    %v593 = vld [vmem:[#allocation7 + $0x10] sm:$0xff]
    %v594 = vld [vmem:[#allocation7 + $0x18] sm:$0xff]
    %v595 = vld [vmem:[#allocation7 + $0x20] sm:$0xff]
    %v596 = vld [vmem:[#allocation7 + $0x28] sm:$0xff]
    %v597 = vld [vmem:[#allocation7 + $0x30] sm:$0xff]
    %v598 = vld [vmem:[#allocation7 + $0x38] sm:$0xff]
    %v599 = vld [vmem:[#allocation7 + $0x40] sm:$0xff]
    %v600 = vld [vmem:[#allocation7 + $0x48] sm:$0xff]
    %v601 = vld [vmem:[#allocation7 + $0x50] sm:$0xff]
    %v602 = vld [vmem:[#allocation7 + $0x58] sm:$0xff]
    %v603 = vld [vmem:[#allocation7 + $0x60] sm:$0xff]
    %v604 = vld [vmem:[#allocation7 + $0x68] sm:$0xff]
    %v605 = vld [vmem:[#allocation7 + $0x70] sm:$0xff]
    %v606 = vld [vmem:[#allocation7 + $0x78] sm:$0xff]
    %s607 = scalar_lea.vmem [#allocation7], 128
    %v608 = vld [vmem:[%s607] sm:$0xff]
    %v609 = vld [vmem:[%s607 + $0x8] sm:$0xff]
    %v610 = vld [vmem:[%s607 + $0x10] sm:$0xff]
    %v611 = vld [vmem:[%s607 + $0x18] sm:$0xff]
    %v612 = vld [vmem:[%s607 + $0x20] sm:$0xff]
    %v613 = vld [vmem:[%s607 + $0x28] sm:$0xff]
    %v614 = vld [vmem:[%s607 + $0x30] sm:$0xff]
    %v615 = vld [vmem:[%s607 + $0x38] sm:$0xff]
    %v616 = vld [vmem:[%s607 + $0x40] sm:$0xff]
    %v617 = vld [vmem:[%s607 + $0x48] sm:$0xff]
    %v618 = vld [vmem:[%s607 + $0x50] sm:$0xff]
    %v619 = vld [vmem:[%s607 + $0x58] sm:$0xff]
    %v620 = vld [vmem:[%s607 + $0x60] sm:$0xff]
    %v621 = vld [vmem:[%s607 + $0x68] sm:$0xff]
    %v622 = vld [vmem:[%s607 + $0x70] sm:$0xff]
    %v623 = vld [vmem:[%s607 + $0x78] sm:$0xff]
    %624 = vmatprep.subr.mxu0 0.0
    %625 = vmatpush1.msra.mxu0 %v608
    %626 = vmatprep.subr.mxu0 0.0
    %627 = vmatpush1.msra.mxu0 %v609
    %628 = vmatprep.subr.mxu0 0.0
    %629 = vmatpush1.msra.mxu0 %v610
    %630 = vmatprep.subr.mxu0 0.0
    %631 = vmatpush1.msra.mxu0 %v611
    %632 = vmatprep.subr.mxu0 0.0
    %633 = vmatpush1.msra.mxu0 %v612
    %634 = vmatprep.subr.mxu0 0.0
    %635 = vmatpush1.msra.mxu0 %v613
    %636 = vmatprep.subr.mxu0 0.0
    %637 = vmatpush1.msra.mxu0 %v614
    %638 = vmatprep.subr.mxu0 0.0
    %639 = vmatpush1.msra.mxu0 %v615
    %640 = vmatprep.subr.mxu0 0.0
    %641 = vmatpush1.msra.mxu0 %v616
    %642 = vmatprep.subr.mxu0 0.0
    %643 = vmatpush1.msra.mxu0 %v617
    %644 = vmatprep.subr.mxu0 0.0
    %645 = vmatpush1.msra.mxu0 %v618
    %646 = vmatprep.subr.mxu0 0.0
    %647 = vmatpush1.msra.mxu0 %v619
    %648 = vmatprep.subr.mxu0 0.0
    %649 = vmatpush1.msra.mxu0 %v620
    %650 = vmatprep.subr.mxu0 0.0
    %651 = vmatpush1.msra.mxu0 %v621
    %652 = vmatprep.subr.mxu0 0.0
    %653 = vmatpush1.msra.mxu0 %v622
    %654 = vmatprep.subr.mxu0 0.0
    %655 = vmatpush1.msra.mxu0 %v623
    %656 = vmatprep.subr.mxu0 0.0
    %657 = vmatpush1.msra.mxu0 0.0
    %658 = vmatprep.subr.mxu0 0.0
    %659 = vmatpush1.msra.mxu0 0.0
    %660 = vmatprep.subr.mxu0 0.0
    %661 = vmatpush1.msra.mxu0 0.0
    %662 = vmatprep.subr.mxu0 0.0
    %663 = vmatpush1.msra.mxu0 0.0
    %664 = vmatprep.subr.mxu0 0.0
    %665 = vmatpush1.msra.mxu0 0.0
    %666 = vmatprep.subr.mxu0 0.0
    %667 = vmatpush1.msra.mxu0 0.0
    %668 = vmatprep.subr.mxu0 0.0
    %669 = vmatpush1.msra.mxu0 0.0
    %670 = vmatprep.subr.mxu0 0.0
    %671 = vmatpush1.msra.mxu0 0.0
    %672 = vmatprep.subr.mxu0 0.0
    %673 = vmatpush1.msra.mxu0 0.0
    %674 = vmatprep.subr.mxu0 0.0
    %675 = vmatpush1.msra.mxu0 0.0
    %676 = vmatprep.subr.mxu0 0.0
    %677 = vmatpush1.msra.mxu0 0.0
    %678 = vmatprep.subr.mxu0 0.0
    %679 = vmatpush1.msra.mxu0 0.0
    %680 = vmatprep.subr.mxu0 0.0
    %681 = vmatpush1.msra.mxu0 0.0
    %682 = vmatprep.subr.mxu0 0.0
    %683 = vmatpush1.msra.mxu0 0.0
    %684 = vmatprep.subr.mxu0 0.0
    %685 = vmatpush1.msra.mxu0 0.0
    %686 = vmatprep.subr.mxu0 0.0
    %687 = vmatpush1.msra.mxu0 0.0
    %688 = vmatprep.mubr.f32.mxu0 0.0
    %689 = vmatmul.mubr.f32.gmra.mrb[0].mxu0 %v563
    %v690 = vpop.f32.mrb[0].mxu0
    %v691 = vadd.f32 0.0, %v690
    %v692 = vpop.f32.mrb[0].mxu0
    %693 = vmatprep.mubr.f32.mxu0 0.0
    %694 = vmatmul.mubr.f32.gmra.mrb[0].mxu0 %v564
    %v695 = vpop.f32.mrb[0].mxu0
    %v696 = vadd.f32 0.0, %v695
    %v697 = vpop.f32.mrb[0].mxu0
    %698 = vmatprep.mubr.f32.mxu0 0.0
    %699 = vmatmul.mubr.f32.gmra.mrb[0].mxu0 %v565
    %v700 = vpop.f32.mrb[0].mxu0
    %v701 = vadd.f32 0.0, %v700
    %v702 = vpop.f32.mrb[0].mxu0
    %703 = vmatprep.mubr.f32.mxu0 0.0
    %704 = vmatmul.mubr.f32.gmra.mrb[0].mxu0 %v566
    %v705 = vpop.f32.mrb[0].mxu0
    %v706 = vadd.f32 0.0, %v705
    %v707 = vpop.f32.mrb[0].mxu0
    %708 = vdwg.mxu0
    %709 = vmatprep.subr.mxu0 0.0
    %710 = vmatpush1.msra.mxu0 %v591
    %711 = vmatprep.subr.mxu0 0.0
    %712 = vmatpush1.msra.mxu0 %v592
    %713 = vmatprep.subr.mxu0 0.0
    %714 = vmatpush1.msra.mxu0 %v593
    %715 = vmatprep.subr.mxu0 0.0
    %716 = vmatpush1.msra.mxu0 %v594
    %717 = vmatprep.subr.mxu0 0.0
    %718 = vmatpush1.msra.mxu0 %v595
    %719 = vmatprep.subr.mxu0 0.0
    %720 = vmatpush1.msra.mxu0 %v596
    %721 = vmatprep.subr.mxu0 0.0
    %722 = vmatpush1.msra.mxu0 %v597
    %723 = vmatprep.subr.mxu0 0.0
    %724 = vmatpush1.msra.mxu0 %v598
    %725 = vmatprep.subr.mxu0 0.0
    %726 = vmatpush1.msra.mxu0 %v599
    %727 = vmatprep.subr.mxu0 0.0
    %728 = vmatpush1.msra.mxu0 %v600
    %729 = vmatprep.subr.mxu0 0.0
    %730 = vmatpush1.msra.mxu0 %v601
    %731 = vmatprep.subr.mxu0 0.0
    %732 = vmatpush1.msra.mxu0 %v602
    %733 = vmatprep.subr.mxu0 0.0
    %734 = vmatpush1.msra.mxu0 %v603
    %735 = vmatprep.subr.mxu0 0.0
    %736 = vmatpush1.msra.mxu0 %v604
    %737 = vmatprep.subr.mxu0 0.0
    %738 = vmatpush1.msra.mxu0 %v605
    %739 = vmatprep.subr.mxu0 0.0
    %740 = vmatpush1.msra.mxu0 %v606
    %741 = vmatprep.subr.mxu0 0.0
    %742 = vmatpush1.msra.mxu0 0.0
    %743 = vmatprep.subr.mxu0 0.0
    %744 = vmatpush1.msra.mxu0 0.0
    %745 = vmatprep.subr.mxu0 0.0
    %746 = vmatpush1.msra.mxu0 0.0
    %747 = vmatprep.subr.mxu0 0.0
    %748 = vmatpush1.msra.mxu0 0.0
    %749 = vmatprep.subr.mxu0 0.0
    %750 = vmatpush1.msra.mxu0 0.0
    %751 = vmatprep.subr.mxu0 0.0
    %752 = vmatpush1.msra.mxu0 0.0
    %753 = vmatprep.subr.mxu0 0.0
    %754 = vmatpush1.msra.mxu0 0.0
    %755 = vmatprep.subr.mxu0 0.0
    %756 = vmatpush1.msra.mxu0 0.0
    %757 = vmatprep.subr.mxu0 0.0
    %758 = vmatpush1.msra.mxu0 0.0
    %759 = vmatprep.subr.mxu0 0.0
    %760 = vmatpush1.msra.mxu0 0.0
    %761 = vmatprep.subr.mxu0 0.0
    %762 = vmatpush1.msra.mxu0 0.0
    %763 = vmatprep.subr.mxu0 0.0
    %764 = vmatpush1.msra.mxu0 0.0
    %765 = vmatprep.subr.mxu0 0.0
    %766 = vmatpush1.msra.mxu0 0.0
    %767 = vmatprep.subr.mxu0 0.0
    %768 = vmatpush1.msra.mxu0 0.0
    %769 = vmatprep.subr.mxu0 0.0
    %770 = vmatpush1.msra.mxu0 0.0
    %771 = vmatprep.subr.mxu0 0.0
    %772 = vmatpush1.msra.mxu0 0.0
    %773 = vmatprep.mubr.f32.mxu0 0.0
    %774 = vmatmul.mubr.f32.gmra.mrb[0].mxu0 %v575
    %v775 = vpop.f32.mrb[0].mxu0
    %v776 = vadd.f32 %v691, %v775
    %v777 = vpop.f32.mrb[0].mxu0
    %778 = vmatprep.mubr.f32.mxu0 0.0
    %779 = vmatmul.mubr.f32.gmra.mrb[0].mxu0 %v576
    %v780 = vpop.f32.mrb[0].mxu0
    %v781 = vadd.f32 %v696, %v780
    %v782 = vpop.f32.mrb[0].mxu0
    %783 = vmatprep.mubr.f32.mxu0 0.0
    %784 = vmatmul.mubr.f32.gmra.mrb[0].mxu0 %v577
    %v785 = vpop.f32.mrb[0].mxu0
    %v786 = vadd.f32 %v701, %v785
    %v787 = vpop.f32.mrb[0].mxu0
    %788 = vmatprep.mubr.f32.mxu0 0.0
    %789 = vmatmul.mubr.f32.gmra.mrb[0].mxu0 %v578
    %v790 = vpop.f32.mrb[0].mxu0
    %v791 = vadd.f32 %v706, %v790
    %v792 = vpop.f32.mrb[0].mxu0
    %793 = vdwg.mxu0
    %s794 = scalar_lea.vmem [#allocation7], 256
    %v795 = vld [vmem:[%s794] sm:$0xff]
    %v796 = vld [vmem:[%s794 + $0x8] sm:$0xff]
    %v797 = vld [vmem:[%s794 + $0x10] sm:$0xff]
    %v798 = vld [vmem:[%s794 + $0x18] sm:$0xff]
    %v799 = vld [vmem:[%s794 + $0x20] sm:$0xff]
    %v800 = vld [vmem:[%s794 + $0x28] sm:$0xff]
    %v801 = vld [vmem:[%s794 + $0x30] sm:$0xff]
    %v802 = vld [vmem:[%s794 + $0x38] sm:$0xff]
    %v803 = vld [vmem:[%s794 + $0x40] sm:$0xff]
    %v804 = vld [vmem:[%s794 + $0x48] sm:$0xff]
    %v805 = vld [vmem:[%s794 + $0x50] sm:$0xff]
    %v806 = vld [vmem:[%s794 + $0x58] sm:$0xff]
    %v807 = vld [vmem:[%s794 + $0x60] sm:$0xff]
    %v808 = vld [vmem:[%s794 + $0x68] sm:$0xff]
    %v809 = vld [vmem:[%s794 + $0x70] sm:$0xff]
    %v810 = vld [vmem:[%s794 + $0x78] sm:$0xff]
    %811 = vmatprep.subr.mxu0 0.0
    %812 = vmatpush1.msra.mxu0 %v795
    %813 = vmatprep.subr.mxu0 0.0
    %814 = vmatpush1.msra.mxu0 %v796
    %815 = vmatprep.subr.mxu0 0.0
    %816 = vmatpush1.msra.mxu0 %v797
    %817 = vmatprep.subr.mxu0 0.0
    %818 = vmatpush1.msra.mxu0 %v798
    %819 = vmatprep.subr.mxu0 0.0
    %820 = vmatpush1.msra.mxu0 %v799
    %821 = vmatprep.subr.mxu0 0.0
    %822 = vmatpush1.msra.mxu0 %v800
    %823 = vmatprep.subr.mxu0 0.0
    %824 = vmatpush1.msra.mxu0 %v801
    %825 = vmatprep.subr.mxu0 0.0
    %826 = vmatpush1.msra.mxu0 %v802
    %827 = vmatprep.subr.mxu0 0.0
    %828 = vmatpush1.msra.mxu0 %v803
    %829 = vmatprep.subr.mxu0 0.0
    %830 = vmatpush1.msra.mxu0 %v804
    %831 = vmatprep.subr.mxu0 0.0
    %832 = vmatpush1.msra.mxu0 %v805
    %833 = vmatprep.subr.mxu0 0.0
    %834 = vmatpush1.msra.mxu0 %v806
    %835 = vmatprep.subr.mxu0 0.0
    %836 = vmatpush1.msra.mxu0 %v807
    %837 = vmatprep.subr.mxu0 0.0
    %838 = vmatpush1.msra.mxu0 %v808
    %839 = vmatprep.subr.mxu0 0.0
    %840 = vmatpush1.msra.mxu0 %v809
    %841 = vmatprep.subr.mxu0 0.0
    %842 = vmatpush1.msra.mxu0 %v810
    %843 = vmatprep.subr.mxu0 0.0
    %844 = vmatpush1.msra.mxu0 0.0
    %845 = vmatprep.subr.mxu0 0.0
    %846 = vmatpush1.msra.mxu0 0.0
    %847 = vmatprep.subr.mxu0 0.0
    %848 = vmatpush1.msra.mxu0 0.0
    %849 = vmatprep.subr.mxu0 0.0
    %850 = vmatpush1.msra.mxu0 0.0
    %851 = vmatprep.subr.mxu0 0.0
    %852 = vmatpush1.msra.mxu0 0.0
    %853 = vmatprep.subr.mxu0 0.0
    %854 = vmatpush1.msra.mxu0 0.0
    %855 = vmatprep.subr.mxu0 0.0
    %856 = vmatpush1.msra.mxu0 0.0
    %857 = vmatprep.subr.mxu0 0.0
    %858 = vmatpush1.msra.mxu0 0.0
    %859 = vmatprep.subr.mxu0 0.0
    %860 = vmatpush1.msra.mxu0 0.0
    %861 = vmatprep.subr.mxu0 0.0
    %862 = vmatpush1.msra.mxu0 0.0
    %863 = vmatprep.subr.mxu0 0.0
    %864 = vmatpush1.msra.mxu0 0.0
    %865 = vmatprep.subr.mxu0 0.0
    %866 = vmatpush1.msra.mxu0 0.0
    %867 = vmatprep.subr.mxu0 0.0
    %868 = vmatpush1.msra.mxu0 0.0
    %869 = vmatprep.subr.mxu0 0.0
    %870 = vmatpush1.msra.mxu0 0.0
    %871 = vmatprep.subr.mxu0 0.0
    %872 = vmatpush1.msra.mxu0 0.0
    %873 = vmatprep.subr.mxu0 0.0
    %874 = vmatpush1.msra.mxu0 0.0
    %875 = vmatprep.mubr.f32.mxu0 0.0
    %876 = vmatmul.mubr.f32.gmra.mrb[0].mxu0 %v587
    %v877 = vpop.f32.mrb[0].mxu0
    %v878 = vadd.f32 0.0, %v877
    %v879 = vpop.f32.mrb[0].mxu0
    %880 = vmatprep.mubr.f32.mxu0 0.0
    %881 = vmatmul.mubr.f32.gmra.mrb[0].mxu0 %v588
    %v882 = vpop.f32.mrb[0].mxu0
    %v883 = vadd.f32 0.0, %v882
    %v884 = vpop.f32.mrb[0].mxu0
    %885 = vmatprep.mubr.f32.mxu0 0.0
    %886 = vmatmul.mubr.f32.gmra.mrb[0].mxu0 %v589
    %v887 = vpop.f32.mrb[0].mxu0
    %v888 = vadd.f32 0.0, %v887
    %v889 = vpop.f32.mrb[0].mxu0
    %890 = vmatprep.mubr.f32.mxu0 0.0
    %891 = vmatmul.mubr.f32.gmra.mrb[0].mxu0 %v590
    %v892 = vpop.f32.mrb[0].mxu0
    %v893 = vadd.f32 0.0, %v892
    %v894 = vpop.f32.mrb[0].mxu0
    %895 = vdwg.mxu0
    %v896 = vadd.f32 %v776, %v878
    %v897 = vadd.f32 %v781, %v883
    %v898 = vadd.f32 %v786, %v888
    %v899 = vadd.f32 %v791, %v893
    %v900 = vld [vmem:[%s5] sm:$0x1]
    %v901 = vld [vmem:[%s6] sm:$0x1]
    %v902 = vadd.f32 %v896, %v897
    %v903 = vadd.f32 %v902, %v898
    %v904 = vadd.f32 %v903, %v899
    %v905 = vrot.slane %v904, 4
    %v906 = vadd.f32 %v904, %v905
    %v907 = vrot.slane %v906, 2
    %v908 = vadd.f32 %v906, %v907
    %v909 = vrot.slane %v908, 1
    %v910 = vadd.f32 %v908, %v909
    %911 = vrot.lane.b32.xlu0 %v910, 8
    %v912 = vpop.permute.xlu0 %911
    %v913 = vadd.f32 %v910, %v912
    %914 = vrot.lane.b32.xlu0 %v913, 16
    %v915 = vpop.permute.xlu0 %914
    %v916 = vadd.f32 %v913, %v915
    %917 = vrot.lane.b32.xlu0 %v916, 32
    %v918 = vpop.permute.xlu0 %917
    %v919 = vadd.f32 %v916, %v918
    %920 = vrot.lane.b32.xlu0 %v919, 64
    %v921 = vpop.permute.xlu0 %920
    %v922 = vadd.f32 %v919, %v921
    %v923 = vmul.f32 %v922, 0.001953125
    %v924 = vlaneseq
    %v925 = vshrl.u32 %v924, 7
    %v926 = vsub.s32 0, %v925
    %v927 = vrot.slane %v923, %v926
    %v928 = vsub.f32 %v896, %v927
    %v929 = vsub.f32 %v897, %v927
    %v930 = vsub.f32 %v898, %v927
    %v931 = vsub.f32 %v899, %v927
    %v932 = vmul.f32 %v928, %v928
    %v933 = vmul.f32 %v929, %v929
    %v934 = vmul.f32 %v930, %v930
    %v935 = vmul.f32 %v931, %v931
    %v936 = vadd.f32 %v932, %v933
    %v937 = vadd.f32 %v936, %v934
    %v938 = vadd.f32 %v937, %v935
    %v939 = vrot.slane %v938, 4
    %v940 = vadd.f32 %v938, %v939
    %v941 = vrot.slane %v940, 2
    %v942 = vadd.f32 %v940, %v941
    %v943 = vrot.slane %v942, 1
    %v944 = vadd.f32 %v942, %v943
    %945 = vrot.lane.b32.xlu0 %v944, 8
    %v946 = vpop.permute.xlu0 %945
    %v947 = vadd.f32 %v944, %v946
    %948 = vrot.lane.b32.xlu0 %v947, 16
    %v949 = vpop.permute.xlu0 %948
    %v950 = vadd.f32 %v947, %v949
    %951 = vrot.lane.b32.xlu0 %v950, 32
    %v952 = vpop.permute.xlu0 %951
    %v953 = vadd.f32 %v950, %v952
    %954 = vrot.lane.b32.xlu0 %v953, 64
    %v955 = vpop.permute.xlu0 %954
    %v956 = vadd.f32 %v953, %v955
    %v957 = vmul.f32 %v956, 0.001953125
    %v958 = vadd.f32 %v957, 1e-05
    %v959 = vrsqrt.pop %v958
    %v960 = vmul.f32 %v959, %v900
    %v961 = vlaneseq
    %v962 = vshrl.u32 %v961, 7
    %v963 = vsub.s32 0, %v962
    %v964 = vrot.slane %v960, %v963
    %v965 = vmul.f32 %v928, %v964
    %v966 = vmul.f32 %v929, %v964
    %v967 = vmul.f32 %v930, %v964
    %v968 = vmul.f32 %v931, %v964
    %v970 = vlaneseq
    %v971 = vshrl.u32 %v970, 7
    %v972 = vsub.s32 0, %v971
    %v973 = vrot.slane %v901, %v972
    %v975 = vadd.f32 %v965, %v973
    %v976 = vadd.f32 %v966, %v973
    %v977 = vadd.f32 %v967, %v973
    %v978 = vadd.f32 %v968, %v973
    %v979 = vmax.f32 %v975, 0.0
    %v980 = vmax.f32 %v976, 0.0
    %v981 = vmax.f32 %v977, 0.0
    %v982 = vmax.f32 %v978, 0.0
    %983 = vst [vmem:[#allocation8] sm:$0xff] %v979
    %984 = vst [vmem:[#allocation8 + $0x8] sm:$0xff] %v980
    %985 = vst [vmem:[#allocation8 + $0x10] sm:$0xff] %v981
    %986 = vst [vmem:[#allocation8 + $0x18] sm:$0xff] %v982
    // Predicated region
    $region42: #{tpu_custom_call.1} parent=1 // pred_check
      _
    $region43: #{tpu_custom_call.1} parent=1 // pred_check_branch
      %988 = sbr.rel (0) target = $region45
    $region44: #{tpu_custom_call.1} parent=1 // pred_region
      %s990 = ssub.s32 512, 512
      %991 = vsyncadd [#allocation4], %s990
      %s992 = sshll.u32 [#allocation8], 4
      %s993 = int_to_ptr.vmem [resolvable:$true] %s992
      %998 = dma.vmem_to_hbm [thread:$0]  %s993, 512, %s7, [#allocation4], 128, 128, 8
    $region45: #{tpu_custom_call.1} parent=1 // pred_fallthru
      _
    // Predicated region
    $region46: #{tpu_custom_call.1} parent=1 // pred_check
      _
    $region47: #{tpu_custom_call.1} parent=1 // pred_check_branch
      %1000 = sbr.rel (0) target = $region49
    $region48: #{tpu_custom_call.1} parent=1 // pred_region
      %1001 = dma.done [#allocation4], 512
    $region49: #{tpu_custom_call.1} parent=1 // pred_fallthru
      _
    %1002 = vsyncpa [#allocation3], 1
    %1003 = vsyncpa [#allocation6], 1
    %1004 = vsyncpa [#allocation4], 1

</llo_original>
